<compile_context>
chip_gen: v6e
topology: v6e:2x2x1
jax: 0.10.0
libtpu: 0.0.40
codegen_flags: <defaults>
</compile_context>

<pallas_src>
import jax
import jax.numpy as jnp
from jax.experimental import pallas as pl
from jax.experimental.pallas import tpu as pltpu


# ----------------------------------------------------------------------------
# Helpers
# ----------------------------------------------------------------------------
def _edges(num_layers):
    """Dense connections: (idx_from, idx_to) with idx_to > idx_from."""
    return [(i, j) for i in range(num_layers - 1) for j in range(i + 1, num_layers)]


def _round_up(n, m):
    return ((n + m - 1) // m) * m


# ----------------------------------------------------------------------------
# Kernel
# ----------------------------------------------------------------------------
def make_dense_mlp_kernel(num_layers, hidden_dim, src_widths, bias_offsets,
                          last_bias_offset, out_pad):
    """Kernel over one batch tile.

    Ref layout: x_ref, W_fused[0..L-2], w_last, bias_all, out_ref
      x_ref      : (TB, input_dim)            bf16
      W_fused[i] : (fan_in_i, width_i*hidden) bf16   (all edges from node i)
      w_last     : (hidden, out_pad)          bf16   (zero-padded to 128 lanes)
      bias_all   : (1, total_bias)            f32    (all edge biases + last bias)
      out_ref    : (TB, out_pad)              f32
    """
    L = num_layers

    def kernel(x_ref, *refs):
        w_refs = refs[:L - 1]
        wl_ref = refs[L - 1]
        bias_ref = refs[L]
        out_ref = refs[L + 1]

        bias_all = bias_ref[...]  # (1, total) f32, resident

        # acc[j] accumulates ctx[j] in f32 (j = 1 .. L-1); node 0 is the input.
        acc = [None] * L

        for i in range(L - 1):
            if i == 0:
                src = x_ref[...]                       # bf16 straight to MXU
            else:
                src = acc[i].astype(jnp.bfloat16)      # ctx[i] fully accumulated

            # One wide matmul covering every edge out of node i.
            h_all = jnp.dot(src, w_refs[i][...],
                            preferred_element_type=jnp.float32)
            n_out = src_widths[i] * hidden_dim
            off = bias_offsets[i]
            b_i = bias_all[:, off:off + n_out]
            h_all = jnp.maximum(h_all + b_i, 0.0)      # Linear + ReLU, f32 epilogue

            # Scatter the fused result into the destination-node accumulators.
            for e, j in enumerate(range(i + 1, L)):
                h = h_all[:, e * hidden_dim:(e + 1) * hidden_dim]
                acc[j] = h if acc[j] is None else acc[j] + h

        # Final linear head (lane-dense, padded to out_pad columns).
        out = jnp.dot(acc[L - 1].astype(jnp.bfloat16), wl_ref[...],
                      preferred_element_type=jnp.float32)
        out = out + bias_all[:, last_bias_offset:last_bias_offset + out_pad]
        out_ref[...] = out.astype(out_ref.dtype)

    return kernel


# ----------------------------------------------------------------------------
# Wrapper
# ----------------------------------------------------------------------------
def dense_mlp_forward(x, params, num_layers, hidden_dim, output_dim, *, tb=16):
    """x: (B, ...) flattened to (B, input_dim) like torch .view(B, -1)."""
    assert num_layers >= 2, "DenseMLP requires num_layers >= 2 (module assert)"

    B = x.shape[0]
    x_flat = x.reshape(B, -1)
    input_dim = x_flat.shape[1]
    out_dtype = x.dtype

    # Pad batch to a full tile (sublane-friendly for bf16) and cast to bf16.
    B_pad = _round_up(max(B, tb), tb)
    if B_pad != B:
        x_flat = jnp.pad(x_flat, ((0, B_pad - B), (0, 0)))
    x_bf = x_flat.astype(jnp.bfloat16)

    # Lane-dense output: pad final layer to a multiple of 128 output lanes.
    out_pad = _round_up(output_dim, 128)

    # ---- host-side packing: fuse per-source weights, pack all biases --------
    fused_w = []
    bias_chunks = []
    bias_offsets = []
    src_widths = []
    off = 0
    for i in range(num_layers - 1):
        ws = [params[("w", i, j)] for j in range(i + 1, num_layers)]
        bs = [params[("b", i, j)].reshape(1, -1) for j in range(i + 1, num_layers)]
        fused_w.append(jnp.concatenate(ws, axis=1).astype(jnp.bfloat16))
        bias_chunks.append(jnp.concatenate(bs, axis=1).astype(jnp.float32))
        bias_offsets.append(off)
        off += bias_chunks[-1].shape[1]
        src_widths.append(num_layers - 1 - i)

    w_last = params["w_last"]
    b_last = params["b_last"].reshape(1, -1)
    if out_pad != output_dim:
        w_last = jnp.pad(w_last, ((0, 0), (0, out_pad - output_dim)))
        b_last = jnp.pad(b_last, ((0, 0), (0, out_pad - output_dim)))
    w_last = w_last.astype(jnp.bfloat16)
    last_bias_offset = off
    bias_chunks.append(b_last.astype(jnp.float32))
    bias_all = jnp.concatenate(bias_chunks, axis=1)

    # ---- specs / grid --------------------------------------------------------
    grid = (B_pad // tb,)
    in_specs = [pl.BlockSpec((tb, input_dim), lambda b: (b, 0))]
    for W in fused_w:
        in_specs.append(pl.BlockSpec(W.shape, lambda b: (0, 0)))   # VMEM-resident
    in_specs.append(pl.BlockSpec(w_last.shape, lambda b: (0, 0)))
    in_specs.append(pl.BlockSpec(bias_all.shape, lambda b: (0, 0)))
    out_spec = pl.BlockSpec((tb, out_pad), lambda b: (b, 0))

    # ---- cost estimate -------------------------------------------------------
    flops = 0
    bytes_accessed = x_bf.size * 2
    for W in fused_w:
        flops += 2 * B_pad * W.shape[0] * W.shape[1]
        bytes_accessed += W.size * 2
    flops += 2 * B_pad * w_last.shape[0] * w_last.shape[1]
    bytes_accessed += w_last.size * 2 + bias_all.size * 4
    bytes_accessed += B_pad * out_pad * jnp.dtype(out_dtype).itemsize

    kernel = make_dense_mlp_kernel(num_layers, hidden_dim, src_widths,
                                   bias_offsets, last_bias_offset, out_pad)

    out_padded = pl.pallas_call(
        kernel,
        out_shape=jax.ShapeDtypeStruct((B_pad, out_pad), out_dtype),
        grid=grid,
        in_specs=in_specs,
        out_specs=out_spec,
        compiler_params=pltpu.CompilerParams(
            dimension_semantics=("parallel",)),
        cost_estimate=pl.CostEstimate(flops=flops, transcendentals=0,
                                      bytes_accessed=bytes_accessed),
    )(x_bf, *fused_w, w_last, bias_all)

    return out_padded[:B, :output_dim]


# ----------------------------------------------------------------------------
# Deterministic parameter construction (xavier_normal weights, zero biases)
# ----------------------------------------------------------------------------
def init_params(key, input_dim, hidden_dim, output_dim, num_layers):
    params = {}
    for (i, j) in _edges(num_layers):
        fan_in = input_dim if i == 0 else hidden_dim
        fan_out = hidden_dim
        key, sub = jax.random.split(key)
        std = (2.0 / (fan_in + fan_out)) ** 0.5
        params[("w", i, j)] = std * jax.random.normal(
            sub, (fan_in, fan_out), jnp.float32)
        params[("b", i, j)] = jnp.zeros((fan_out,), jnp.float32)   # torch-style 1-D bias
    key, sub = jax.random.split(key)
    std = (2.0 / (hidden_dim + output_dim)) ** 0.5
    params["w_last"] = std * jax.random.normal(
        sub, (hidden_dim, output_dim), jnp.float32)
    params["b_last"] = jnp.zeros((output_dim,), jnp.float32)
    return params


# ----------------------------------------------------------------------------
# Pure-JAX reference mirroring the PyTorch forward (same bf16-operand / f32-acc
# numerics as the kernel, so tolerances stay tight)
# ----------------------------------------------------------------------------
def dense_mlp_reference(x, params, num_layers, hidden_dim):
    B = x.shape[0]
    xf = x.reshape(B, -1).astype(jnp.bfloat16)
    ctx = [jnp.zeros((B, hidden_dim), jnp.float32) for _ in range(num_layers)]
    for i in range(num_layers - 1):
        src = xf if i == 0 else ctx[i].astype(jnp.bfloat16)
        for j in range(i + 1, num_layers):
            h = jnp.dot(src, params[("w", i, j)].astype(jnp.bfloat16),
                        preferred_element_type=jnp.float32)
            h = h + params[("b", i, j)].reshape(1, -1).astype(jnp.float32)
            ctx[j] = ctx[j] + jnp.maximum(h, 0.0)
    out = jnp.dot(ctx[-1].astype(jnp.bfloat16),
                  params["w_last"].astype(jnp.bfloat16),
                  preferred_element_type=jnp.float32)
    return out + params["b_last"].reshape(1, -1)


# ----------------------------------------------------------------------------
if __name__ == "__main__":
    key = jax.random.PRNGKey(0)

    B, C, H, W = 2, 4, 16, 16          # NCHW input, flattened in forward
    input_dim = C * H * W              # 1024
    hidden_dim = 32
    output_dim = 8
    num_layers = 3                     # module default

    key, xkey = jax.random.split(key)
    x = jax.random.normal(xkey, (B, C, H, W), jnp.float32)

    params = init_params(key, input_dim, hidden_dim, output_dim, num_layers)

    out = dense_mlp_forward(x, params, num_layers, hidden_dim, output_dim)
    out = jax.block_until_ready(out)

    ref = dense_mlp_reference(x, params, num_layers, hidden_dim)
    assert out.shape == (B, output_dim)
    assert jnp.allclose(out, ref, atol=1e-3, rtol=1e-3), "mismatch vs reference"

    print("KERNEL_OK")
</pallas_src>

<mosaic_0001>
module attributes {stable_mosaic.version = 11 : i64} {
  func.func @kernel(%arg0: i32, %arg1: memref<16x1024xbf16, #tpu.memory_space<vmem>>, %arg2: memref<1024x64xbf16, #tpu.memory_space<vmem>>, %arg3: memref<32x32xbf16, #tpu.memory_space<vmem>>, %arg4: memref<32x128xbf16, #tpu.memory_space<vmem>>, %arg5: memref<1x224xf32, #tpu.memory_space<vmem>>, %arg6: memref<16x128xf32, #tpu.memory_space<vmem>>) attributes {dimension_semantics = [#tpu.dimension_semantics<parallel>], iteration_bounds = array<i64: 1>, scalar_prefetch = 0 : i64, scratch_operands = 0 : i64, tpu.core_type = #tpu.core_type<tc>, window_params = [{transform_indices = @transform_0, window_bounds = array<i64: 16, 1024>}, {pipeline_mode = #tpu.pipeline_mode<synchronous>, transform_indices = @transform_1, window_bounds = array<i64: 1024, 64>}, {pipeline_mode = #tpu.pipeline_mode<synchronous>, transform_indices = @transform_2, window_bounds = array<i64: 32, 32>}, {pipeline_mode = #tpu.pipeline_mode<synchronous>, transform_indices = @transform_3, window_bounds = array<i64: 32, 128>}, {pipeline_mode = #tpu.pipeline_mode<synchronous>, transform_indices = @transform_4, window_bounds = array<i64: 1, 224>}, {transform_indices = @transform_5, window_bounds = array<i64: 16, 128>}]} {
    %c0 = arith.constant 0 : index
    %c0_0 = arith.constant 0 : index
    %0 = vector.load %arg5[%c0, %c0_0] : memref<1x224xf32, #tpu.memory_space<vmem>>, vector<1x224xf32>
    %c0_1 = arith.constant 0 : index
    %c0_2 = arith.constant 0 : index
    %1 = vector.load %arg1[%c0_1, %c0_2] : memref<16x1024xbf16, #tpu.memory_space<vmem>>, vector<16x1024xbf16>
    %c0_3 = arith.constant 0 : index
    %c0_4 = arith.constant 0 : index
    %2 = vector.load %arg2[%c0_3, %c0_4] : memref<1024x64xbf16, #tpu.memory_space<vmem>>, vector<1024x64xbf16>
    %cst = arith.constant dense<0.000000e+00> : vector<16x64xf32>
    %3 = tpu.matmul %1, %2, %cst {dimension_numbers = #tpu.dot_dimension_numbers<[1], [0], [0], [1], [0, 0, 1, 1], [], []>} : vector<16x1024xbf16>, vector<1024x64xbf16>, vector<16x64xf32> -> vector<16x64xf32>
    %4 = vector.extract_strided_slice %0 {offsets = [0, 0], sizes = [1, 64], strides = [1, 1]} : vector<1x224xf32> to vector<1x64xf32>
    %5 = vector.broadcast %4 : vector<1x64xf32> to vector<16x64xf32>
    %6 = arith.addf %3, %5 : vector<16x64xf32>
    %cst_5 = arith.constant 0.000000e+00 : f32
    %7 = vector.broadcast %cst_5 : f32 to vector<16x64xf32>
    %8 = arith.maximumf %6, %7 : vector<16x64xf32>
    %9 = vector.extract_strided_slice %8 {offsets = [0, 0], sizes = [16, 32], strides = [1, 1]} : vector<16x64xf32> to vector<16x32xf32>
    %10 = vector.extract_strided_slice %8 {offsets = [0, 32], sizes = [16, 32], strides = [1, 1]} : vector<16x64xf32> to vector<16x32xf32>
    %11 = arith.truncf %9 : vector<16x32xf32> to vector<16x32xbf16>
    %c0_6 = arith.constant 0 : index
    %c0_7 = arith.constant 0 : index
    %12 = vector.load %arg3[%c0_6, %c0_7] : memref<32x32xbf16, #tpu.memory_space<vmem>>, vector<32x32xbf16>
    %cst_8 = arith.constant dense<0.000000e+00> : vector<16x32xf32>
    %13 = tpu.matmul %11, %12, %cst_8 {dimension_numbers = #tpu.dot_dimension_numbers<[1], [0], [0], [1], [0, 0, 1, 1], [], []>} : vector<16x32xbf16>, vector<32x32xbf16>, vector<16x32xf32> -> vector<16x32xf32>
    %14 = vector.extract_strided_slice %0 {offsets = [0, 64], sizes = [1, 32], strides = [1, 1]} : vector<1x224xf32> to vector<1x32xf32>
    %15 = vector.broadcast %14 : vector<1x32xf32> to vector<16x32xf32>
    %16 = arith.addf %13, %15 : vector<16x32xf32>
    %cst_9 = arith.constant 0.000000e+00 : f32
    %17 = vector.broadcast %cst_9 : f32 to vector<16x32xf32>
    %18 = arith.maximumf %16, %17 : vector<16x32xf32>
    %19 = arith.addf %10, %18 : vector<16x32xf32>
    %20 = arith.truncf %19 : vector<16x32xf32> to vector<16x32xbf16>
    %c0_10 = arith.constant 0 : index
    %c0_11 = arith.constant 0 : index
    %21 = vector.load %arg4[%c0_10, %c0_11] : memref<32x128xbf16, #tpu.memory_space<vmem>>, vector<32x128xbf16>
    %cst_12 = arith.constant dense<0.000000e+00> : vector<16x128xf32>
    %22 = tpu.matmul %20, %21, %cst_12 {dimension_numbers = #tpu.dot_dimension_numbers<[1], [0], [0], [1], [0, 0, 1, 1], [], []>} : vector<16x32xbf16>, vector<32x128xbf16>, vector<16x128xf32> -> vector<16x128xf32>
    %23 = vector.extract_strided_slice %0 {offsets = [0, 96], sizes = [1, 128], strides = [1, 1]} : vector<1x224xf32> to vector<1x128xf32>
    %24 = vector.broadcast %23 : vector<1x128xf32> to vector<16x128xf32>
    %25 = arith.addf %22, %24 : vector<16x128xf32>
    %c0_13 = arith.constant 0 : index
    %c0_14 = arith.constant 0 : index
    %26 = vector.load %arg6[%c0_13, %c0_14] : memref<16x128xf32, #tpu.memory_space<vmem>>, vector<16x128xf32>
    tpu.vector_store %arg6[%c0_13, %c0_14], %25 {strides = array<i32>} : memref<16x128xf32, #tpu.memory_space<vmem>>, vector<16x128xf32>,
    return
  }
  func.func @transform_0(%arg0: i32) -> (i32, i32) {
    %c0_i32 = arith.constant 0 : i32
    %c0_i32_0 = arith.constant 0 : i32
    return %arg0, %c0_i32 : i32, i32
  }
  func.func @transform_1(%arg0: i32) -> (i32, i32) {
    %c0_i32 = arith.constant 0 : i32
    %c0_i32_0 = arith.constant 0 : i32
    %c0_i32_1 = arith.constant 0 : i32
    return %c0_i32, %c0_i32_0 : i32, i32
  }
  func.func @transform_2(%arg0: i32) -> (i32, i32) {
    %c0_i32 = arith.constant 0 : i32
    %c0_i32_0 = arith.constant 0 : i32
    %c0_i32_1 = arith.constant 0 : i32
    return %c0_i32, %c0_i32_0 : i32, i32
  }
  func.func @transform_3(%arg0: i32) -> (i32, i32) {
    %c0_i32 = arith.constant 0 : i32
    %c0_i32_0 = arith.constant 0 : i32
    %c0_i32_1 = arith.constant 0 : i32
    return %c0_i32, %c0_i32_0 : i32, i32
  }
  func.func @transform_4(%arg0: i32) -> (i32, i32) {
    %c0_i32 = arith.constant 0 : i32
    %c0_i32_0 = arith.constant 0 : i32
    %c0_i32_1 = arith.constant 0 : i32
    return %c0_i32, %c0_i32_0 : i32, i32
  }
  func.func @transform_5(%arg0: i32) -> (i32, i32) {
    %c0_i32 = arith.constant 0 : i32
    %c0_i32_0 = arith.constant 0 : i32
    return %arg0, %c0_i32 : i32, i32
  }
}

</mosaic_0001>

<llo_original>
// kernel: tpu_custom_call.1
$region0: #{tpu_custom_call.1}
  #allocation0 [shape = 'u32[]', space=smem, size = 0x4, offset = 0x4, fixed_abs, tag = 'smem constant byte address 0x4 - core index']
  #allocation1 [shape = 'u32[144,128]{1,0:T(1,128)}', space=vmem, size = 0x12000, scoped, tag = 'internal scratch']
  %s0 = inlined_call_operand.vmem [shape: bf16[16,1024], index: 0, kind: input, shape index: {}]
  %s1 = inlined_call_operand.vmem [shape: bf16[1024,64], index: 1, kind: input, shape index: {}]
  %s2 = inlined_call_operand.vmem [shape: bf16[32,32], index: 2, kind: input, shape index: {}]
  %s3 = inlined_call_operand.vmem [shape: bf16[32,128], index: 3, kind: input, shape index: {}]
  %s4 = inlined_call_operand.vmem [shape: f32[1,224], index: 4, kind: input, shape index: {}]
  %s5 = inlined_call_operand.hbm [shape: f32[16,128], index: 5, kind: output, shape index: {}]
  %s6 = sld [smem:[#allocation0]]
  $region30: #{tpu_custom_call.1} parent=0
    _
  %s8 = ssub.s32 1, %s6
  %s9 = scalar_select 0, %s8, %s6
  $region1: #{tpu_custom_call.1} parent=0
    #allocation2 [shape = 'u8[8192]{0}', space=vmem, size = 0x2000, scoped, tag = 'output window, operand 0, single buffered']
    #allocation3 [shape = 's32[1]{0}', space=sflag, size = 0x4, scoped, tag = 'scoped memory for tpu_custom_call.1']
    %10 = vsyncpa [#allocation3], 0
    // Predicated region
    $region2: #{tpu_custom_call.1} parent=1 // pred_check
      _
    $region3: #{tpu_custom_call.1} parent=1 // pred_check_branch
      %12 = sbr.rel (0) target = $region5
    $region4: #{tpu_custom_call.1} parent=1 // pred_region
      _
    $region5: #{tpu_custom_call.1} parent=1 // pred_fallthru
      _
    // Predicated region
    $region6: #{tpu_custom_call.1} parent=1 // pred_check
      _
    $region7: #{tpu_custom_call.1} parent=1 // pred_check_branch
      %14 = sbr.rel (0) target = $region9
    $region8: #{tpu_custom_call.1} parent=1 // pred_region
      _
    $region9: #{tpu_custom_call.1} parent=1 // pred_fallthru
      _
    // Predicated region
    $region10: #{tpu_custom_call.1} parent=1 // pred_check
      _
    $region11: #{tpu_custom_call.1} parent=1 // pred_check_branch
      %16 = sbr.rel (0) target = $region13
    $region12: #{tpu_custom_call.1} parent=1 // pred_region
      _
    $region13: #{tpu_custom_call.1} parent=1 // pred_fallthru
      _
    // Predicated region
    $region14: #{tpu_custom_call.1} parent=1 // pred_check
      _
    $region15: #{tpu_custom_call.1} parent=1 // pred_check_branch
      %18 = sbr.rel (0) target = $region17
    $region16: #{tpu_custom_call.1} parent=1 // pred_region
      _
    $region17: #{tpu_custom_call.1} parent=1 // pred_fallthru
      _
    // Predicated region
    $region18: #{tpu_custom_call.1} parent=1 // pred_check
      _
    $region19: #{tpu_custom_call.1} parent=1 // pred_check_branch
      %20 = sbr.rel (0) target = $region21
    $region20: #{tpu_custom_call.1} parent=1 // pred_region
      _
    $region21: #{tpu_custom_call.1} parent=1 // pred_fallthru
      _
    %v22 = vld [vmem:[%s4] sm:$0x3]
    %v23 = vld [vmem:[%s0] sm:$0xff]
    %v24 = vld [vmem:[%s0 + $0x8] sm:$0xff]
    %v25 = vld [vmem:[%s0 + $0x10] sm:$0xff]
    %v26 = vld [vmem:[%s0 + $0x18] sm:$0xff]
    %v27 = vld [vmem:[%s0 + $0x20] sm:$0xff]
    %v28 = vld [vmem:[%s0 + $0x28] sm:$0xff]
    %v29 = vld [vmem:[%s0 + $0x30] sm:$0xff]
    %v30 = vld [vmem:[%s0 + $0x38] sm:$0xff]
    %v31 = vld [vmem:[%s1] sm:$0xf]
    %v32 = vld [vmem:[%s1 + $0x4] sm:$0xf]
    %v33 = vld [vmem:[%s1 + $0x8] sm:$0xf]
    %v34 = vld [vmem:[%s1 + $0xc] sm:$0xf]
    %v35 = vld [vmem:[%s1 + $0x10] sm:$0xf]
    %v36 = vld [vmem:[%s1 + $0x14] sm:$0xf]
    %v37 = vld [vmem:[%s1 + $0x18] sm:$0xf]
    %v38 = vld [vmem:[%s1 + $0x1c] sm:$0xf]
    %v39 = vld [vmem:[%s1 + $0x20] sm:$0xf]
    %v40 = vld [vmem:[%s1 + $0x24] sm:$0xf]
    %v41 = vld [vmem:[%s1 + $0x28] sm:$0xf]
    %v42 = vld [vmem:[%s1 + $0x2c] sm:$0xf]
    %v43 = vld [vmem:[%s1 + $0x30] sm:$0xf]
    %v44 = vld [vmem:[%s1 + $0x34] sm:$0xf]
    %v45 = vld [vmem:[%s1 + $0x38] sm:$0xf]
    %v46 = vld [vmem:[%s1 + $0x3c] sm:$0xf]
    %v47 = vld [vmem:[%s1 + $0x40] sm:$0xf]
    %v48 = vld [vmem:[%s1 + $0x44] sm:$0xf]
    %v49 = vld [vmem:[%s1 + $0x48] sm:$0xf]
    %v50 = vld [vmem:[%s1 + $0x4c] sm:$0xf]
    %v51 = vld [vmem:[%s1 + $0x50] sm:$0xf]
    %v52 = vld [vmem:[%s1 + $0x54] sm:$0xf]
    %v53 = vld [vmem:[%s1 + $0x58] sm:$0xf]
    %v54 = vld [vmem:[%s1 + $0x5c] sm:$0xf]
    %v55 = vld [vmem:[%s1 + $0x60] sm:$0xf]
    %v56 = vld [vmem:[%s1 + $0x64] sm:$0xf]
    %v57 = vld [vmem:[%s1 + $0x68] sm:$0xf]
    %v58 = vld [vmem:[%s1 + $0x6c] sm:$0xf]
    %v59 = vld [vmem:[%s1 + $0x70] sm:$0xf]
    %v60 = vld [vmem:[%s1 + $0x74] sm:$0xf]
    %v61 = vld [vmem:[%s1 + $0x78] sm:$0xf]
    %v62 = vld [vmem:[%s1 + $0x7c] sm:$0xf]
    %v63 = vld [vmem:[%s1 + $0x80] sm:$0xf]
    %v64 = vld [vmem:[%s1 + $0x84] sm:$0xf]
    %v65 = vld [vmem:[%s1 + $0x88] sm:$0xf]
    %v66 = vld [vmem:[%s1 + $0x8c] sm:$0xf]
    %v67 = vld [vmem:[%s1 + $0x90] sm:$0xf]
    %v68 = vld [vmem:[%s1 + $0x94] sm:$0xf]
    %v69 = vld [vmem:[%s1 + $0x98] sm:$0xf]
    %v70 = vld [vmem:[%s1 + $0x9c] sm:$0xf]
    %v71 = vld [vmem:[%s1 + $0xa0] sm:$0xf]
    %v72 = vld [vmem:[%s1 + $0xa4] sm:$0xf]
    %v73 = vld [vmem:[%s1 + $0xa8] sm:$0xf]
    %v74 = vld [vmem:[%s1 + $0xac] sm:$0xf]
    %v75 = vld [vmem:[%s1 + $0xb0] sm:$0xf]
    %v76 = vld [vmem:[%s1 + $0xb4] sm:$0xf]
    %v77 = vld [vmem:[%s1 + $0xb8] sm:$0xf]
    %v78 = vld [vmem:[%s1 + $0xbc] sm:$0xf]
    %v79 = vld [vmem:[%s1 + $0xc0] sm:$0xf]
    %v80 = vld [vmem:[%s1 + $0xc4] sm:$0xf]
    %v81 = vld [vmem:[%s1 + $0xc8] sm:$0xf]
    %v82 = vld [vmem:[%s1 + $0xcc] sm:$0xf]
    %v83 = vld [vmem:[%s1 + $0xd0] sm:$0xf]
    %v84 = vld [vmem:[%s1 + $0xd4] sm:$0xf]
    %v85 = vld [vmem:[%s1 + $0xd8] sm:$0xf]
    %v86 = vld [vmem:[%s1 + $0xdc] sm:$0xf]
    %v87 = vld [vmem:[%s1 + $0xe0] sm:$0xf]
    %v88 = vld [vmem:[%s1 + $0xe4] sm:$0xf]
    %v89 = vld [vmem:[%s1 + $0xe8] sm:$0xf]
    %v90 = vld [vmem:[%s1 + $0xec] sm:$0xf]
    %v91 = vld [vmem:[%s1 + $0xf0] sm:$0xf]
    %v92 = vld [vmem:[%s1 + $0xf4] sm:$0xf]
    %v93 = vld [vmem:[%s1 + $0xf8] sm:$0xf]
    %v94 = vld [vmem:[%s1 + $0xfc] sm:$0xf]
    %v95 = vld [vmem:[%s1 + $0x100] sm:$0xf]
    %v96 = vld [vmem:[%s1 + $0x104] sm:$0xf]
    %v97 = vld [vmem:[%s1 + $0x108] sm:$0xf]
    %v98 = vld [vmem:[%s1 + $0x10c] sm:$0xf]
    %v99 = vld [vmem:[%s1 + $0x110] sm:$0xf]
    %v100 = vld [vmem:[%s1 + $0x114] sm:$0xf]
    %v101 = vld [vmem:[%s1 + $0x118] sm:$0xf]
    %v102 = vld [vmem:[%s1 + $0x11c] sm:$0xf]
    %v103 = vld [vmem:[%s1 + $0x120] sm:$0xf]
    %v104 = vld [vmem:[%s1 + $0x124] sm:$0xf]
    %v105 = vld [vmem:[%s1 + $0x128] sm:$0xf]
    %v106 = vld [vmem:[%s1 + $0x12c] sm:$0xf]
    %v107 = vld [vmem:[%s1 + $0x130] sm:$0xf]
    %v108 = vld [vmem:[%s1 + $0x134] sm:$0xf]
    %v109 = vld [vmem:[%s1 + $0x138] sm:$0xf]
    %v110 = vld [vmem:[%s1 + $0x13c] sm:$0xf]
    %v111 = vld [vmem:[%s1 + $0x140] sm:$0xf]
    %v112 = vld [vmem:[%s1 + $0x144] sm:$0xf]
    %v113 = vld [vmem:[%s1 + $0x148] sm:$0xf]
    %v114 = vld [vmem:[%s1 + $0x14c] sm:$0xf]
    %v115 = vld [vmem:[%s1 + $0x150] sm:$0xf]
    %v116 = vld [vmem:[%s1 + $0x154] sm:$0xf]
    %v117 = vld [vmem:[%s1 + $0x158] sm:$0xf]
    %v118 = vld [vmem:[%s1 + $0x15c] sm:$0xf]
    %v119 = vld [vmem:[%s1 + $0x160] sm:$0xf]
    %v120 = vld [vmem:[%s1 + $0x164] sm:$0xf]
    %v121 = vld [vmem:[%s1 + $0x168] sm:$0xf]
    %v122 = vld [vmem:[%s1 + $0x16c] sm:$0xf]
    %v123 = vld [vmem:[%s1 + $0x170] sm:$0xf]
    %v124 = vld [vmem:[%s1 + $0x174] sm:$0xf]
    %v125 = vld [vmem:[%s1 + $0x178] sm:$0xf]
    %v126 = vld [vmem:[%s1 + $0x17c] sm:$0xf]
    %v127 = vld [vmem:[%s1 + $0x180] sm:$0xf]
    %v128 = vld [vmem:[%s1 + $0x184] sm:$0xf]
    %v129 = vld [vmem:[%s1 + $0x188] sm:$0xf]
    %v130 = vld [vmem:[%s1 + $0x18c] sm:$0xf]
    %v131 = vld [vmem:[%s1 + $0x190] sm:$0xf]
    %v132 = vld [vmem:[%s1 + $0x194] sm:$0xf]
    %v133 = vld [vmem:[%s1 + $0x198] sm:$0xf]
    %v134 = vld [vmem:[%s1 + $0x19c] sm:$0xf]
    %v135 = vld [vmem:[%s1 + $0x1a0] sm:$0xf]
    %v136 = vld [vmem:[%s1 + $0x1a4] sm:$0xf]
    %v137 = vld [vmem:[%s1 + $0x1a8] sm:$0xf]
    %v138 = vld [vmem:[%s1 + $0x1ac] sm:$0xf]
    %v139 = vld [vmem:[%s1 + $0x1b0] sm:$0xf]
    %v140 = vld [vmem:[%s1 + $0x1b4] sm:$0xf]
    %v141 = vld [vmem:[%s1 + $0x1b8] sm:$0xf]
    %v142 = vld [vmem:[%s1 + $0x1bc] sm:$0xf]
    %v143 = vld [vmem:[%s1 + $0x1c0] sm:$0xf]
    %v144 = vld [vmem:[%s1 + $0x1c4] sm:$0xf]
    %v145 = vld [vmem:[%s1 + $0x1c8] sm:$0xf]
    %v146 = vld [vmem:[%s1 + $0x1cc] sm:$0xf]
    %v147 = vld [vmem:[%s1 + $0x1d0] sm:$0xf]
    %v148 = vld [vmem:[%s1 + $0x1d4] sm:$0xf]
    %v149 = vld [vmem:[%s1 + $0x1d8] sm:$0xf]
    %v150 = vld [vmem:[%s1 + $0x1dc] sm:$0xf]
    %v151 = vld [vmem:[%s1 + $0x1e0] sm:$0xf]
    %v152 = vld [vmem:[%s1 + $0x1e4] sm:$0xf]
    %v153 = vld [vmem:[%s1 + $0x1e8] sm:$0xf]
    %v154 = vld [vmem:[%s1 + $0x1ec] sm:$0xf]
    %v155 = vld [vmem:[%s1 + $0x1f0] sm:$0xf]
    %v156 = vld [vmem:[%s1 + $0x1f4] sm:$0xf]
    %v157 = vld [vmem:[%s1 + $0x1f8] sm:$0xf]
    %v158 = vld [vmem:[%s1 + $0x1fc] sm:$0xf]
    %v160 = vlaneseq
    %v161 = vshrl.u32 %v160, 7
    %v162 = vsub.s32 0, %v161
    %v163 = vrot.slane %v22, %v162
    %v173 = vunpack.c.l.b16 %v23
    %v174 = vunpack.c.h.b16 %v23
    %v175 = vunpack.c.l.b16 %v24
    %v176 = vunpack.c.h.b16 %v24
    %v177 = vunpack.c.l.b16 %v25
    %v178 = vunpack.c.h.b16 %v25
    %v179 = vunpack.c.l.b16 %v26
    %v180 = vunpack.c.h.b16 %v26
    %v181 = vunpack.c.l.b16 %v27
    %v182 = vunpack.c.h.b16 %v27
    %v183 = vunpack.c.l.b16 %v28
    %v184 = vunpack.c.h.b16 %v28
    %v185 = vunpack.c.l.b16 %v29
    %v186 = vunpack.c.h.b16 %v29
    %v187 = vunpack.c.l.b16 %v30
    %v188 = vunpack.c.h.b16 %v30
    %v189 = vpack.c.b16 %v181, %v173
    %v190 = vpack.c.b16 %v182, %v174
    %v191 = vpack.c.b16 %v183, %v175
    %v192 = vpack.c.b16 %v184, %v176
    %v193 = vpack.c.b16 %v185, %v177
    %v194 = vpack.c.b16 %v186, %v178
    %v195 = vpack.c.b16 %v187, %v179
    %v196 = vpack.c.b16 %v188, %v180
    %v333 = vunpack.c.l.b16 %v31
    %v334 = vunpack.c.l.b16 %v32
    %v335 = vunpack.c.l.b16 %v33
    %v336 = vunpack.c.l.b16 %v34
    %v337 = vunpack.c.l.b16 %v35
    %v338 = vunpack.c.l.b16 %v36
    %v339 = vunpack.c.l.b16 %v37
    %v340 = vunpack.c.l.b16 %v38
    %v341 = vunpack.c.l.b16 %v39
    %v342 = vunpack.c.l.b16 %v40
    %v343 = vunpack.c.l.b16 %v41
    %v344 = vunpack.c.l.b16 %v42
    %v345 = vunpack.c.l.b16 %v43
    %v346 = vunpack.c.l.b16 %v44
    %v347 = vunpack.c.l.b16 %v45
    %v348 = vunpack.c.l.b16 %v46
    %v349 = vunpack.c.l.b16 %v47
    %v350 = vunpack.c.l.b16 %v48
    %v351 = vunpack.c.l.b16 %v49
    %v352 = vunpack.c.l.b16 %v50
    %v353 = vunpack.c.l.b16 %v51
    %v354 = vunpack.c.l.b16 %v52
    %v355 = vunpack.c.l.b16 %v53
    %v356 = vunpack.c.l.b16 %v54
    %v357 = vunpack.c.l.b16 %v55
    %v358 = vunpack.c.l.b16 %v56
    %v359 = vunpack.c.l.b16 %v57
    %v360 = vunpack.c.l.b16 %v58
    %v361 = vunpack.c.l.b16 %v59
    %v362 = vunpack.c.l.b16 %v60
    %v363 = vunpack.c.l.b16 %v61
    %v364 = vunpack.c.l.b16 %v62
    %v365 = vunpack.c.l.b16 %v63
    %v366 = vunpack.c.l.b16 %v64
    %v367 = vunpack.c.l.b16 %v65
    %v368 = vunpack.c.l.b16 %v66
    %v369 = vunpack.c.l.b16 %v67
    %v370 = vunpack.c.l.b16 %v68
    %v371 = vunpack.c.l.b16 %v69
    %v372 = vunpack.c.l.b16 %v70
    %v373 = vunpack.c.l.b16 %v71
    %v374 = vunpack.c.l.b16 %v72
    %v375 = vunpack.c.l.b16 %v73
    %v376 = vunpack.c.l.b16 %v74
    %v377 = vunpack.c.l.b16 %v75
    %v378 = vunpack.c.l.b16 %v76
    %v379 = vunpack.c.l.b16 %v77
    %v380 = vunpack.c.l.b16 %v78
    %v381 = vunpack.c.l.b16 %v79
    %v382 = vunpack.c.l.b16 %v80
    %v383 = vunpack.c.l.b16 %v81
    %v384 = vunpack.c.l.b16 %v82
    %v385 = vunpack.c.l.b16 %v83
    %v386 = vunpack.c.l.b16 %v84
    %v387 = vunpack.c.l.b16 %v85
    %v388 = vunpack.c.l.b16 %v86
    %v389 = vunpack.c.l.b16 %v87
    %v390 = vunpack.c.l.b16 %v88
    %v391 = vunpack.c.l.b16 %v89
    %v392 = vunpack.c.l.b16 %v90
    %v393 = vunpack.c.l.b16 %v91
    %v394 = vunpack.c.l.b16 %v92
    %v395 = vunpack.c.l.b16 %v93
    %v396 = vunpack.c.l.b16 %v94
    %v397 = vunpack.c.l.b16 %v95
    %v398 = vunpack.c.l.b16 %v96
    %v399 = vunpack.c.l.b16 %v97
    %v400 = vunpack.c.l.b16 %v98
    %v401 = vunpack.c.l.b16 %v99
    %v402 = vunpack.c.l.b16 %v100
    %v403 = vunpack.c.l.b16 %v101
    %v404 = vunpack.c.l.b16 %v102
    %v405 = vunpack.c.l.b16 %v103
    %v406 = vunpack.c.l.b16 %v104
    %v407 = vunpack.c.l.b16 %v105
    %v408 = vunpack.c.l.b16 %v106
    %v409 = vunpack.c.l.b16 %v107
    %v410 = vunpack.c.l.b16 %v108
    %v411 = vunpack.c.l.b16 %v109
    %v412 = vunpack.c.l.b16 %v110
    %v413 = vunpack.c.l.b16 %v111
    %v414 = vunpack.c.l.b16 %v112
    %v415 = vunpack.c.l.b16 %v113
    %v416 = vunpack.c.l.b16 %v114
    %v417 = vunpack.c.l.b16 %v115
    %v418 = vunpack.c.l.b16 %v116
    %v419 = vunpack.c.l.b16 %v117
    %v420 = vunpack.c.l.b16 %v118
    %v421 = vunpack.c.l.b16 %v119
    %v422 = vunpack.c.l.b16 %v120
    %v423 = vunpack.c.l.b16 %v121
    %v424 = vunpack.c.l.b16 %v122
    %v425 = vunpack.c.l.b16 %v123
    %v426 = vunpack.c.l.b16 %v124
    %v427 = vunpack.c.l.b16 %v125
    %v428 = vunpack.c.l.b16 %v126
    %v429 = vunpack.c.l.b16 %v127
    %v430 = vunpack.c.l.b16 %v128
    %v431 = vunpack.c.l.b16 %v129
    %v432 = vunpack.c.l.b16 %v130
    %v433 = vunpack.c.l.b16 %v131
    %v434 = vunpack.c.l.b16 %v132
    %v435 = vunpack.c.l.b16 %v133
    %v436 = vunpack.c.l.b16 %v134
    %v437 = vunpack.c.l.b16 %v135
    %v438 = vunpack.c.l.b16 %v136
    %v439 = vunpack.c.l.b16 %v137
    %v440 = vunpack.c.l.b16 %v138
    %v441 = vunpack.c.l.b16 %v139
    %v442 = vunpack.c.l.b16 %v140
    %v443 = vunpack.c.l.b16 %v141
    %v444 = vunpack.c.l.b16 %v142
    %v445 = vunpack.c.l.b16 %v143
    %v446 = vunpack.c.l.b16 %v144
    %v447 = vunpack.c.l.b16 %v145
    %v448 = vunpack.c.l.b16 %v146
    %v449 = vunpack.c.l.b16 %v147
    %v450 = vunpack.c.l.b16 %v148
    %v451 = vunpack.c.l.b16 %v149
    %v452 = vunpack.c.l.b16 %v150
    %v453 = vunpack.c.l.b16 %v151
    %v454 = vunpack.c.l.b16 %v152
    %v455 = vunpack.c.l.b16 %v153
    %v456 = vunpack.c.l.b16 %v154
    %v457 = vunpack.c.l.b16 %v155
    %v458 = vunpack.c.l.b16 %v156
    %v459 = vunpack.c.l.b16 %v157
    %v460 = vunpack.c.l.b16 %v158
    %v461 = vpack.c.b16 %v334, %v333
    %v462 = vpack.c.b16 %v336, %v335
    %v463 = vpack.c.b16 %v338, %v337
    %v464 = vpack.c.b16 %v340, %v339
    %v465 = vpack.c.b16 %v342, %v341
    %v466 = vpack.c.b16 %v344, %v343
    %v467 = vpack.c.b16 %v346, %v345
    %v468 = vpack.c.b16 %v348, %v347
    %v469 = vpack.c.b16 %v350, %v349
    %v470 = vpack.c.b16 %v352, %v351
    %v471 = vpack.c.b16 %v354, %v353
    %v472 = vpack.c.b16 %v356, %v355
    %v473 = vpack.c.b16 %v358, %v357
    %v474 = vpack.c.b16 %v360, %v359
    %v475 = vpack.c.b16 %v362, %v361
    %v476 = vpack.c.b16 %v364, %v363
    %v477 = vpack.c.b16 %v366, %v365
    %v478 = vpack.c.b16 %v368, %v367
    %v479 = vpack.c.b16 %v370, %v369
    %v480 = vpack.c.b16 %v372, %v371
    %v481 = vpack.c.b16 %v374, %v373
    %v482 = vpack.c.b16 %v376, %v375
    %v483 = vpack.c.b16 %v378, %v377
    %v484 = vpack.c.b16 %v380, %v379
    %v485 = vpack.c.b16 %v382, %v381
    %v486 = vpack.c.b16 %v384, %v383
    %v487 = vpack.c.b16 %v386, %v385
    %v488 = vpack.c.b16 %v388, %v387
    %v489 = vpack.c.b16 %v390, %v389
    %v490 = vpack.c.b16 %v392, %v391
    %v491 = vpack.c.b16 %v394, %v393
    %v492 = vpack.c.b16 %v396, %v395
    %v493 = vpack.c.b16 %v398, %v397
    %v494 = vpack.c.b16 %v400, %v399
    %v495 = vpack.c.b16 %v402, %v401
    %v496 = vpack.c.b16 %v404, %v403
    %v497 = vpack.c.b16 %v406, %v405
    %v498 = vpack.c.b16 %v408, %v407
    %v499 = vpack.c.b16 %v410, %v409
    %v500 = vpack.c.b16 %v412, %v411
    %v501 = vpack.c.b16 %v414, %v413
    %v502 = vpack.c.b16 %v416, %v415
    %v503 = vpack.c.b16 %v418, %v417
    %v504 = vpack.c.b16 %v420, %v419
    %v505 = vpack.c.b16 %v422, %v421
    %v506 = vpack.c.b16 %v424, %v423
    %v507 = vpack.c.b16 %v426, %v425
    %v508 = vpack.c.b16 %v428, %v427
    %v509 = vpack.c.b16 %v430, %v429
    %v510 = vpack.c.b16 %v432, %v431
    %v511 = vpack.c.b16 %v434, %v433
    %v512 = vpack.c.b16 %v436, %v435
    %v513 = vpack.c.b16 %v438, %v437
    %v514 = vpack.c.b16 %v440, %v439
    %v515 = vpack.c.b16 %v442, %v441
    %v516 = vpack.c.b16 %v444, %v443
    %v517 = vpack.c.b16 %v446, %v445
    %v518 = vpack.c.b16 %v448, %v447
    %v519 = vpack.c.b16 %v450, %v449
    %v520 = vpack.c.b16 %v452, %v451
    %v521 = vpack.c.b16 %v454, %v453
    %v522 = vpack.c.b16 %v456, %v455
    %v523 = vpack.c.b16 %v458, %v457
    %v524 = vpack.c.b16 %v460, %v459
    %589 = vmatprep.subr.bf16.mxu0 0
    %590 = vmatpush1.bf16.msra.mxu0 %v468
    %591 = vmatprep.subr.bf16.mxu0 0
    %592 = vmatpush1.bf16.msra.mxu0 %v467
    %593 = vmatprep.subr.bf16.mxu0 0
    %594 = vmatpush1.bf16.msra.mxu0 %v466
    %595 = vmatprep.subr.bf16.mxu0 0
    %596 = vmatpush1.bf16.msra.mxu0 %v465
    %597 = vmatprep.subr.bf16.mxu0 0
    %598 = vmatpush1.bf16.msra.mxu0 %v464
    %599 = vmatprep.subr.bf16.mxu0 0
    %600 = vmatpush1.bf16.msra.mxu0 %v463
    %601 = vmatprep.subr.bf16.mxu0 0
    %602 = vmatpush1.bf16.msra.mxu0 %v462
    %603 = vmatprep.subr.bf16.mxu0 0
    %604 = vmatpush1.bf16.msra.mxu0 %v461
    %605 = vmatprep.subr.bf16.mxu0 0
    %606 = vmatpush2.bf16.msra.mxu0 %v476
    %607 = vmatprep.subr.bf16.mxu0 0
    %608 = vmatpush2.bf16.msra.mxu0 %v475
    %609 = vmatprep.subr.bf16.mxu0 0
    %610 = vmatpush2.bf16.msra.mxu0 %v474
    %611 = vmatprep.subr.bf16.mxu0 0
    %612 = vmatpush2.bf16.msra.mxu0 %v473
    %613 = vmatprep.subr.bf16.mxu0 0
    %614 = vmatpush2.bf16.msra.mxu0 %v472
    %615 = vmatprep.subr.bf16.mxu0 0
    %616 = vmatpush2.bf16.msra.mxu0 %v471
    %617 = vmatprep.subr.bf16.mxu0 0
    %618 = vmatpush2.bf16.msra.mxu0 %v470
    %619 = vmatprep.subr.bf16.mxu0 0
    %620 = vmatpush2.bf16.msra.mxu0 %v469
    %621 = vmatprep.mubr.bf16.mxu0 %v190
    %622 = vmatmul.mubr.bf16.gmra.mxu0 %v189
    %v623 = vpop.f32.mrf.mxu0
    %v624 = vadd.f32 %v163, %v623
    %v625 = vpop.f32.mrf.mxu0
    %v626 = vpop.f32.mrf.mxu0
    %v627 = vadd.f32 %v163, %v626
    %v628 = vpop.f32.mrf.mxu0
    %629 = vdwg.mxu0
    %630 = vmatprep.subr.bf16.mxu0 0
    %631 = vmatpush1.bf16.msra.mxu0 %v484
    %632 = vmatprep.subr.bf16.mxu0 0
    %633 = vmatpush1.bf16.msra.mxu0 %v483
    %634 = vmatprep.subr.bf16.mxu0 0
    %635 = vmatpush1.bf16.msra.mxu0 %v482
    %636 = vmatprep.subr.bf16.mxu0 0
    %637 = vmatpush1.bf16.msra.mxu0 %v481
    %638 = vmatprep.subr.bf16.mxu0 0
    %639 = vmatpush1.bf16.msra.mxu0 %v480
    %640 = vmatprep.subr.bf16.mxu0 0
    %641 = vmatpush1.bf16.msra.mxu0 %v479
    %642 = vmatprep.subr.bf16.mxu0 0
    %643 = vmatpush1.bf16.msra.mxu0 %v478
    %644 = vmatprep.subr.bf16.mxu0 0
    %645 = vmatpush1.bf16.msra.mxu0 %v477
    %646 = vmatprep.subr.bf16.mxu0 0
    %647 = vmatpush2.bf16.msra.mxu0 %v492
    %648 = vmatprep.subr.bf16.mxu0 0
    %649 = vmatpush2.bf16.msra.mxu0 %v491
    %650 = vmatprep.subr.bf16.mxu0 0
    %651 = vmatpush2.bf16.msra.mxu0 %v490
    %652 = vmatprep.subr.bf16.mxu0 0
    %653 = vmatpush2.bf16.msra.mxu0 %v489
    %654 = vmatprep.subr.bf16.mxu0 0
    %655 = vmatpush2.bf16.msra.mxu0 %v488
    %656 = vmatprep.subr.bf16.mxu0 0
    %657 = vmatpush2.bf16.msra.mxu0 %v487
    %658 = vmatprep.subr.bf16.mxu0 0
    %659 = vmatpush2.bf16.msra.mxu0 %v486
    %660 = vmatprep.subr.bf16.mxu0 0
    %661 = vmatpush2.bf16.msra.mxu0 %v485
    %662 = vmatprep.mubr.bf16.mxu0 %v192
    %663 = vmatmul.mubr.bf16.gmra.mxu0 %v191
    %v664 = vpop.f32.mrf.mxu0
    %v665 = vadd.f32 %v624, %v664
    %v666 = vpop.f32.mrf.mxu0
    %v667 = vpop.f32.mrf.mxu0
    %v668 = vadd.f32 %v627, %v667
    %v669 = vpop.f32.mrf.mxu0
    %670 = vdwg.mxu0
    %671 = vmatprep.subr.bf16.mxu0 0
    %672 = vmatpush1.bf16.msra.mxu0 %v500
    %673 = vmatprep.subr.bf16.mxu0 0
    %674 = vmatpush1.bf16.msra.mxu0 %v499
    %675 = vmatprep.subr.bf16.mxu0 0
    %676 = vmatpush1.bf16.msra.mxu0 %v498
    %677 = vmatprep.subr.bf16.mxu0 0
    %678 = vmatpush1.bf16.msra.mxu0 %v497
    %679 = vmatprep.subr.bf16.mxu0 0
    %680 = vmatpush1.bf16.msra.mxu0 %v496
    %681 = vmatprep.subr.bf16.mxu0 0
    %682 = vmatpush1.bf16.msra.mxu0 %v495
    %683 = vmatprep.subr.bf16.mxu0 0
    %684 = vmatpush1.bf16.msra.mxu0 %v494
    %685 = vmatprep.subr.bf16.mxu0 0
    %686 = vmatpush1.bf16.msra.mxu0 %v493
    %687 = vmatprep.subr.bf16.mxu0 0
    %688 = vmatpush2.bf16.msra.mxu0 %v508
    %689 = vmatprep.subr.bf16.mxu0 0
    %690 = vmatpush2.bf16.msra.mxu0 %v507
    %691 = vmatprep.subr.bf16.mxu0 0
    %692 = vmatpush2.bf16.msra.mxu0 %v506
    %693 = vmatprep.subr.bf16.mxu0 0
    %694 = vmatpush2.bf16.msra.mxu0 %v505
    %695 = vmatprep.subr.bf16.mxu0 0
    %696 = vmatpush2.bf16.msra.mxu0 %v504
    %697 = vmatprep.subr.bf16.mxu0 0
    %698 = vmatpush2.bf16.msra.mxu0 %v503
    %699 = vmatprep.subr.bf16.mxu0 0
    %700 = vmatpush2.bf16.msra.mxu0 %v502
    %701 = vmatprep.subr.bf16.mxu0 0
    %702 = vmatpush2.bf16.msra.mxu0 %v501
    %703 = vmatprep.mubr.bf16.mxu0 %v194
    %704 = vmatmul.mubr.bf16.gmra.mxu0 %v193
    %v705 = vpop.f32.mrf.mxu0
    %v706 = vadd.f32 %v665, %v705
    %v707 = vpop.f32.mrf.mxu0
    %v708 = vpop.f32.mrf.mxu0
    %v709 = vadd.f32 %v668, %v708
    %v710 = vpop.f32.mrf.mxu0
    %711 = vdwg.mxu0
    %712 = vmatprep.subr.bf16.mxu0 0
    %713 = vmatpush1.bf16.msra.mxu0 %v516
    %714 = vmatprep.subr.bf16.mxu0 0
    %715 = vmatpush1.bf16.msra.mxu0 %v515
    %716 = vmatprep.subr.bf16.mxu0 0
    %717 = vmatpush1.bf16.msra.mxu0 %v514
    %718 = vmatprep.subr.bf16.mxu0 0
    %719 = vmatpush1.bf16.msra.mxu0 %v513
    %720 = vmatprep.subr.bf16.mxu0 0
    %721 = vmatpush1.bf16.msra.mxu0 %v512
    %722 = vmatprep.subr.bf16.mxu0 0
    %723 = vmatpush1.bf16.msra.mxu0 %v511
    %724 = vmatprep.subr.bf16.mxu0 0
    %725 = vmatpush1.bf16.msra.mxu0 %v510
    %726 = vmatprep.subr.bf16.mxu0 0
    %727 = vmatpush1.bf16.msra.mxu0 %v509
    %728 = vmatprep.subr.bf16.mxu0 0
    %729 = vmatpush2.bf16.msra.mxu0 %v524
    %730 = vmatprep.subr.bf16.mxu0 0
    %731 = vmatpush2.bf16.msra.mxu0 %v523
    %732 = vmatprep.subr.bf16.mxu0 0
    %733 = vmatpush2.bf16.msra.mxu0 %v522
    %734 = vmatprep.subr.bf16.mxu0 0
    %735 = vmatpush2.bf16.msra.mxu0 %v521
    %736 = vmatprep.subr.bf16.mxu0 0
    %737 = vmatpush2.bf16.msra.mxu0 %v520
    %738 = vmatprep.subr.bf16.mxu0 0
    %739 = vmatpush2.bf16.msra.mxu0 %v519
    %740 = vmatprep.subr.bf16.mxu0 0
    %741 = vmatpush2.bf16.msra.mxu0 %v518
    %742 = vmatprep.subr.bf16.mxu0 0
    %743 = vmatpush2.bf16.msra.mxu0 %v517
    %744 = vmatprep.mubr.bf16.mxu0 %v196
    %745 = vmatmul.mubr.bf16.gmra.mxu0 %v195
    %v746 = vpop.f32.mrf.mxu0
    %v747 = vadd.f32 %v706, %v746
    %v748 = vpop.f32.mrf.mxu0
    %v749 = vpop.f32.mrf.mxu0
    %v750 = vadd.f32 %v709, %v749
    %v751 = vpop.f32.mrf.mxu0
    %752 = vdwg.mxu0
    %v753 = vmax.f32 %v747, 0.0
    %v754 = vmax.f32 %v750, 0.0
    %v755 = vpack.c.bf16 %v754, %v753
    %v756 = vld [vmem:[%s2] sm:$0xf]
    %v757 = vld [vmem:[%s2 + $0x4] sm:$0xf]
    %v758 = vld [vmem:[%s2 + $0x8] sm:$0xf]
    %v759 = vld [vmem:[%s2 + $0xc] sm:$0xf]
    %v764 = vunpack.c.l.b16 %v756
    %v765 = vunpack.c.l.b16 %v757
    %v766 = vunpack.c.l.b16 %v758
    %v767 = vunpack.c.l.b16 %v759
    %v768 = vpack.c.b16 %v765, %v764
    %v769 = vpack.c.b16 %v767, %v766
    %772 = vrot.lane.b32.xlu0 %v163, 64
    %v773 = vpop.permute.xlu0 %772
    %vm775 = vcmask 261120
    %v777 = vsel %vm775, %v755, 0
    %779 = vmatprep.subr.bf16.mxu0 0
    %780 = vmatpush1.bf16.msra.mxu0 0
    %781 = vmatprep.subr.bf16.mxu0 0
    %782 = vmatpush1.bf16.msra.mxu0 0
    %783 = vmatprep.subr.bf16.mxu0 0
    %784 = vmatpush1.bf16.msra.mxu0 0
    %785 = vmatprep.subr.bf16.mxu0 0
    %786 = vmatpush1.bf16.msra.mxu0 0
    %787 = vmatprep.subr.bf16.mxu0 0
    %788 = vmatpush1.bf16.msra.mxu0 0
    %789 = vmatprep.subr.bf16.mxu0 0
    %790 = vmatpush1.bf16.msra.mxu0 0
    %791 = vmatprep.subr.bf16.mxu0 0
    %792 = vmatpush1.bf16.msra.mxu0 %v769
    %793 = vmatprep.subr.bf16.mxu0 0
    %794 = vmatpush1.bf16.msra.mxu0 %v768
    %795 = vmatprep.subr.bf16.mxu0 0
    %796 = vmatpush2.bf16.msra.mxu0 0
    %797 = vmatprep.subr.bf16.mxu0 0
    %798 = vmatpush2.bf16.msra.mxu0 0
    %799 = vmatprep.subr.bf16.mxu0 0
    %800 = vmatpush2.bf16.msra.mxu0 0
    %801 = vmatprep.subr.bf16.mxu0 0
    %802 = vmatpush2.bf16.msra.mxu0 0
    %803 = vmatprep.subr.bf16.mxu0 0
    %804 = vmatpush2.bf16.msra.mxu0 0
    %805 = vmatprep.subr.bf16.mxu0 0
    %806 = vmatpush2.bf16.msra.mxu0 0
    %807 = vmatprep.subr.bf16.mxu0 0
    %808 = vmatpush2.bf16.msra.mxu0 0
    %809 = vmatprep.subr.bf16.mxu0 0
    %810 = vmatpush2.bf16.msra.mxu0 0
    %811 = vmatprep.mubr.bf16.mxu0 0
    %812 = vmatmul.mubr.bf16.gmra.mxu0 %v777
    %v813 = vpop.f32.mrf.mxu0
    %v814 = vadd.f32 %v773, %v813
    %v815 = vpop.f32.mrf.mxu0
    %v816 = vpop.f32.mrf.mxu0
    %v817 = vadd.f32 %v773, %v816
    %v818 = vpop.f32.mrf.mxu0
    %819 = vdwg.mxu0
    %v820 = vmax.f32 %v814, 0.0
    %v821 = vmax.f32 %v817, 0.0
    %824 = vrot.lane.b32.xlu0 %v820, 32
    %v825 = vpop.permute.xlu0 %824
    %826 = vrot.lane.b32.xlu0 %v821, 32
    %v827 = vpop.permute.xlu0 %826
    %v830 = vadd.f32 %v753, %v825
    %v831 = vadd.f32 %v754, %v827
    %v832 = vpack.c.bf16 %v831, %v830
    %v833 = vld [vmem:[%s3] sm:$0xf]
    %v834 = vld [vmem:[%s3 + $0x4] sm:$0xf]
    %v835 = vld [vmem:[%s3 + $0x8] sm:$0xf]
    %v836 = vld [vmem:[%s3 + $0xc] sm:$0xf]
    %v837 = vlaneseq
    %v838 = vshrl.u32 %v837, 7
    %v839 = vsub.s32 1, %v838
    %v840 = vrot.slane %v22, %v839
    %842 = vrot.lane.b32.xlu0 %v832, 96
    %v843 = vpop.permute.xlu0 %842
    %v848 = vunpack.c.l.b16 %v833
    %v849 = vunpack.c.l.b16 %v834
    %v850 = vunpack.c.l.b16 %v835
    %v851 = vunpack.c.l.b16 %v836
    %v852 = vpack.c.b16 %v849, %v848
    %v853 = vpack.c.b16 %v851, %v850
    %856 = vrot.lane.b32.xlu0 %v163, 32
    %v857 = vpop.permute.xlu0 %856
    %858 = vrot.lane.b32.xlu0 %v840, 32
    %v859 = vpop.permute.xlu0 %858
    %v860 = vsel %vm775, %v857, %v859
    %v863 = vsel %vm775, %v843, 0
    %865 = vmatprep.subr.bf16.mxu0 0
    %866 = vmatpush1.bf16.msra.mxu0 0
    %867 = vmatprep.subr.bf16.mxu0 0
    %868 = vmatpush1.bf16.msra.mxu0 0
    %869 = vmatprep.subr.bf16.mxu0 0
    %870 = vmatpush1.bf16.msra.mxu0 0
    %871 = vmatprep.subr.bf16.mxu0 0
    %872 = vmatpush1.bf16.msra.mxu0 0
    %873 = vmatprep.subr.bf16.mxu0 0
    %874 = vmatpush1.bf16.msra.mxu0 0
    %875 = vmatprep.subr.bf16.mxu0 0
    %876 = vmatpush1.bf16.msra.mxu0 0
    %877 = vmatprep.subr.bf16.mxu0 0
    %878 = vmatpush1.bf16.msra.mxu0 %v853
    %879 = vmatprep.subr.bf16.mxu0 0
    %880 = vmatpush1.bf16.msra.mxu0 %v852
    %881 = vmatprep.subr.bf16.mxu0 0
    %882 = vmatpush2.bf16.msra.mxu0 0
    %883 = vmatprep.subr.bf16.mxu0 0
    %884 = vmatpush2.bf16.msra.mxu0 0
    %885 = vmatprep.subr.bf16.mxu0 0
    %886 = vmatpush2.bf16.msra.mxu0 0
    %887 = vmatprep.subr.bf16.mxu0 0
    %888 = vmatpush2.bf16.msra.mxu0 0
    %889 = vmatprep.subr.bf16.mxu0 0
    %890 = vmatpush2.bf16.msra.mxu0 0
    %891 = vmatprep.subr.bf16.mxu0 0
    %892 = vmatpush2.bf16.msra.mxu0 0
    %893 = vmatprep.subr.bf16.mxu0 0
    %894 = vmatpush2.bf16.msra.mxu0 0
    %895 = vmatprep.subr.bf16.mxu0 0
    %896 = vmatpush2.bf16.msra.mxu0 0
    %897 = vmatprep.mubr.bf16.mxu0 0
    %898 = vmatmul.mubr.bf16.gmra.mxu0 %v863
    %v899 = vpop.f32.mrf.mxu0
    %v900 = vadd.f32 %v860, %v899
    %v901 = vpop.f32.mrf.mxu0
    %v902 = vpop.f32.mrf.mxu0
    %v903 = vadd.f32 %v860, %v902
    %v904 = vpop.f32.mrf.mxu0
    %905 = vdwg.mxu0
    %906 = vst [vmem:[#allocation2] sm:$0xff] %v900
    %907 = vst [vmem:[#allocation2 + $0x8] sm:$0xff] %v903
    // Predicated region
    $region22: #{tpu_custom_call.1} parent=1 // pred_check
      _
    $region23: #{tpu_custom_call.1} parent=1 // pred_check_branch
      %909 = sbr.rel (0) target = $region25
    $region24: #{tpu_custom_call.1} parent=1 // pred_region
      %s911 = ssub.s32 256, 256
      %912 = vsyncadd [#allocation3], %s911
      %s913 = sshll.u32 [#allocation2], 4
      %s914 = int_to_ptr.vmem [resolvable:$true] %s913
      %919 = dma.vmem_to_hbm [thread:$0]  %s914, 256, %s5, [#allocation3], 128, 128, 8
    $region25: #{tpu_custom_call.1} parent=1 // pred_fallthru
      _
    // Predicated region
    $region26: #{tpu_custom_call.1} parent=1 // pred_check
      _
    $region27: #{tpu_custom_call.1} parent=1 // pred_check_branch
      %921 = sbr.rel (0) target = $region29
    $region28: #{tpu_custom_call.1} parent=1 // pred_region
      %922 = dma.done [#allocation3], 256
    $region29: #{tpu_custom_call.1} parent=1 // pred_fallthru
      _
    %923 = vsyncpa [#allocation3], 1

</llo_original>
